<compile_context>
chip_gen: v5e
topology: v5e:2x2
jax: 0.10.0
libtpu: 0.0.40
codegen_flags: <defaults>
</compile_context>

<pallas_src>
import functools

import jax
import jax.numpy as jnp
from jax.experimental import pallas as pl
from jax.experimental.pallas import tpu as pltpu


def _hloss_kernel(x_ref, part_ref, *, n_rows, tile_n):
    i = pl.program_id(0)

    x = x_ref[...].astype(jnp.float32)                      # (tile_n, C)

    # Numerically-stable softmax pieces along the last (lane) axis.
    m = jnp.max(x, axis=-1, keepdims=True)                  # (tile_n, 1)
    s = x - m
    e = jnp.exp(s)
    z = jnp.sum(e, axis=-1, keepdims=True)                  # (tile_n, 1)

    # sum_c p*logp = sum_c(e*s)/z - log z   (uses sum_c p == 1). Exact /z and
    # log(z) on the narrow column only (required for the 1e-6 tolerance).
    row_ent = jnp.sum(e * s, axis=-1, keepdims=True) / z - jnp.log(z)

    # Mask rows past the true row count (padded last tile). Garbage (even
    # NaN/Inf) in padded rows cannot propagate through the unselected branch.
    row_ids = i * tile_n + jax.lax.broadcasted_iota(jnp.int32, (tile_n, 1), 0)
    valid = row_ids < n_rows
    row_ent = jnp.where(valid, row_ent, 0.0)                # (tile_n, 1)

    partial = jnp.sum(row_ent, keepdims=True)               # (1, 1) tile partial
    # Lane-dense, (8,128)-aligned partial block; wrapper reads element [0, 0].
    part_ref[...] = jnp.broadcast_to(partial, part_ref.shape)


def _tile_budget():
    """Generation-aware (input-tile bytes, vmem_limit_bytes)."""
    vmem_bytes = 64 * 1024 * 1024  # conservative fallback (v7x-like)
    try:
        info = pltpu.get_tpu_info()
        vmem_bytes = int(getattr(info, "vmem_capacity_bytes", vmem_bytes))
    except Exception:
        pass
    if vmem_bytes >= 100 * 1024 * 1024:
        # v5e / v6e: 128 MiB physical VMEM. 8 MiB input tile -> ~16 MiB
        # double-buffered + ~32 MiB f32 temporaries: comfortably under limit.
        return 8 * 1024 * 1024, 96 * 1024 * 1024
    # v7x: 64 MiB physical VMEM per TC. 4 MiB input tile -> ~8 MiB
    # double-buffered + ~16 MiB temporaries.
    return 4 * 1024 * 1024, 48 * 1024 * 1024


def hloss(x, tile_n=None):
    """x: [N, C] float array -> scalar f32: -mean(softmax(x)*log_softmax(x))."""
    N, C = x.shape
    itemsize = jnp.dtype(x.dtype).itemsize

    target_tile_bytes, vmem_limit = _tile_budget()

    if tile_n is None:
        tile_n = max(8, (target_tile_bytes // (C * itemsize)) // 8 * 8)

    # Guarantee >= 2 grid steps whenever possible so the "parallel" axis
    # shards across both TensorCores on v7x (no single-step collapse).
    if N > 8:
        half = ((pl.cdiv(N, 2) + 7) // 8) * 8
        tile_n = min(tile_n, half)

    if tile_n >= N:
        tile_n = N                      # single block = full sublane extent (legal)
    else:
        tile_n = max(8, (tile_n // 8) * 8)
    num_tiles = pl.cdiv(N, tile_n)

    kernel = functools.partial(_hloss_kernel, n_rows=N, tile_n=tile_n)

    partials = pl.pallas_call(
        kernel,
        out_shape=jax.ShapeDtypeStruct((num_tiles * 8, 128), jnp.float32),
        grid=(num_tiles,),
        in_specs=[pl.BlockSpec((tile_n, C), lambda i: (i, 0))],
        out_specs=pl.BlockSpec((8, 128), lambda i: (i, 0)),
        compiler_params=pltpu.CompilerParams(
            dimension_semantics=("parallel",),
            vmem_limit_bytes=vmem_limit,
        ),
        cost_estimate=pl.CostEstimate(
            flops=5 * N * C,
            transcendentals=N * C + 2 * N,   # exp per element; log + recip per row
            bytes_accessed=N * C * itemsize + num_tiles * 8 * 128 * 4,
        ),
    )(x)

    total = jnp.sum(partials.reshape(num_tiles, 8, 128)[:, 0, 0])
    return -total / jnp.float32(N * C)


def _ref_hloss(x):
    xf = x.astype(jnp.float32)
    p = jax.nn.softmax(xf, axis=-1)
    logp = jax.nn.log_softmax(xf, axis=-1)
    return -jnp.mean(p * logp)


if __name__ == "__main__":
    key = jax.random.PRNGKey(0)
    k1, k2 = jax.random.split(key)

    # Small 2-D (batch, classes) input matching the module's forward.
    x1 = jax.random.normal(k1, (8, 128), dtype=jnp.float32)
    out1 = jax.block_until_ready(hloss(x1))
    ref1 = _ref_hloss(x1)
    assert jnp.allclose(out1, ref1, rtol=1e-5, atol=1e-6), (out1, ref1)

    # Multi-tile case exercising the >=2-step split and the masked partial
    # last tile: 300 rows -> two 152-row tiles (rows 300..303 masked).
    x2 = jax.random.normal(k2, (300, 128), dtype=jnp.float32)
    out2 = jax.block_until_ready(hloss(x2))
    ref2 = _ref_hloss(x2)
    assert jnp.allclose(out2, ref2, rtol=1e-5, atol=1e-6), (out2, ref2)

    print("KERNEL_OK")
</pallas_src>

<mosaic_0001>
module attributes {stable_mosaic.version = 11 : i64} {
  func.func @_hloss_kernel(%arg0: i32, %arg1: memref<8x128xf32, #tpu.memory_space<vmem>>, %arg2: memref<8x128xf32, #tpu.memory_space<vmem>>) attributes {dimension_semantics = [#tpu.dimension_semantics<parallel>], iteration_bounds = array<i64: 1>, scalar_prefetch = 0 : i64, scratch_operands = 0 : i64, tpu.core_type = #tpu.core_type<tc>, window_params = [{transform_indices = @transform_0, window_bounds = array<i64: 8, 128>}, {transform_indices = @transform_1, window_bounds = array<i64: 8, 128>}]} {
    %c0 = arith.constant 0 : index
    %c0_0 = arith.constant 0 : index
    %0 = vector.load %arg1[%c0, %c0_0] : memref<8x128xf32, #tpu.memory_space<vmem>>, vector<8x128xf32>
    %cst = arith.constant dense<0xFF800000> : vector<8xf32>
    %1 = vector.multi_reduction <maximumf>, %0, %cst [1] : vector<8x128xf32> to vector<8xf32>
    %2 = vector.shape_cast %1 : vector<8xf32> to vector<8x1xf32>
    %3 = vector.broadcast %2 : vector<8x1xf32> to vector<8x128xf32>
    %4 = arith.subf %0, %3 : vector<8x128xf32>
    %5 = math.exp %4 : vector<8x128xf32>
    %cst_1 = arith.constant dense<0.000000e+00> : vector<8xf32>
    %6 = vector.multi_reduction <add>, %5, %cst_1 [1] : vector<8x128xf32> to vector<8xf32>
    %7 = vector.shape_cast %6 : vector<8xf32> to vector<8x1xf32>
    %8 = arith.mulf %5, %4 : vector<8x128xf32>
    %cst_2 = arith.constant dense<0.000000e+00> : vector<8xf32>
    %9 = vector.multi_reduction <add>, %8, %cst_2 [1] : vector<8x128xf32> to vector<8xf32>
    %10 = vector.shape_cast %9 : vector<8xf32> to vector<8x1xf32>
    %11 = arith.divf %10, %7 : vector<8x1xf32>
    %12 = math.log %7 : vector<8x1xf32>
    %13 = arith.subf %11, %12 : vector<8x1xf32>
    %c8_i32 = arith.constant 8 : i32
    %14 = arith.muli %arg0, %c8_i32 : i32
    %15 = tpu.iota {dimensions = array<i32: 0>} : vector<8x1xi32>
    %16 = vector.broadcast %14 : i32 to vector<8x1xi32>
    %17 = arith.addi %16, %15 : vector<8x1xi32>
    %c8_i32_3 = arith.constant 8 : i32
    %18 = vector.broadcast %c8_i32_3 : i32 to vector<8x1xi32>
    %19 = arith.cmpi slt, %17, %18 : vector<8x1xi32>
    %cst_4 = arith.constant 0.000000e+00 : f32
    %20 = vector.broadcast %cst_4 : f32 to vector<8x1xf32>
    %21 = arith.select %19, %13, %20 : vector<8x1xi1>, vector<8x1xf32>
    %22 = vector.shape_cast %21 : vector<8x1xf32> to vector<1x8x1xf32>
    %cst_5 = arith.constant dense<0.000000e+00> : vector<1xf32>
    %23 = vector.multi_reduction <add>, %22, %cst_5 [1, 2] : vector<1x8x1xf32> to vector<1xf32>
    %24 = vector.shape_cast %23 : vector<1xf32> to vector<1x1x1xf32>
    %25 = vector.extract %24[0, 0, 0] : f32 from vector<1x1x1xf32>
    %26 = vector.broadcast %25 : f32 to vector<1x1xf32>
    %27 = vector.shape_cast %26 : vector<1x1xf32> to vector<1x1xf32>
    %28 = vector.broadcast %27 : vector<1x1xf32> to vector<8x128xf32>
    %c0_6 = arith.constant 0 : index
    %c0_7 = arith.constant 0 : index
    %29 = vector.load %arg2[%c0_6, %c0_7] : memref<8x128xf32, #tpu.memory_space<vmem>>, vector<8x128xf32>
    tpu.vector_store %arg2[%c0_6, %c0_7], %28 {strides = array<i32>} : memref<8x128xf32, #tpu.memory_space<vmem>>, vector<8x128xf32>,
    return
  }
  func.func @transform_0(%arg0: i32) -> (i32, i32) {
    %c0_i32 = arith.constant 0 : i32
    %c0_i32_0 = arith.constant 0 : i32
    return %arg0, %c0_i32 : i32, i32
  }
  func.func @transform_1(%arg0: i32) -> (i32, i32) {
    %c0_i32 = arith.constant 0 : i32
    %c0_i32_0 = arith.constant 0 : i32
    return %arg0, %c0_i32 : i32, i32
  }
}

</mosaic_0001>

<llo_original>
// kernel: tpu_custom_call.1
$region0: #{tpu_custom_call.1}
  #allocation0 [shape = 'u32[]', space=smem, size = 0x4, offset = 0x4, fixed_abs, tag = 'smem constant byte address 0x4 - core index']
  #allocation1 [shape = 'u32[72,128]{1,0:T(1,128)}', space=vmem, size = 0x9000, scoped, tag = 'internal scratch']
  %s0 = inlined_call_operand.hbm [shape: f32[8,128], index: 0, kind: input, shape index: {}]
  %s1 = inlined_call_operand.hbm [shape: f32[8,128], index: 1, kind: output, shape index: {}]
  %s2 = sld [smem:[#allocation0]]
  $region18: #{tpu_custom_call.1} parent=0
    _
  %s4 = ssub.s32 1, %s2
  %s5 = scalar_select 0, %s4, %s2
  $region1: #{tpu_custom_call.1} parent=0
    #allocation2 [shape = 'u8[4096]{0}', space=vmem, size = 0x1000, scoped, tag = 'input window, operand 0, single buffered']
    #allocation3 [shape = 's32[1]{0}', space=sflag, size = 0x4, scoped, tag = 'scoped memory for tpu_custom_call.1']
    #allocation4 [shape = 's32[1]{0}', space=sflag, size = 0x4, scoped, tag = 'scoped memory for tpu_custom_call.1']
    #allocation5 [shape = 'u8[4096]{0}', space=vmem, size = 0x1000, scoped, tag = 'output window, operand 0, single buffered']
    %6 = vsyncpa [#allocation3], 0
    %7 = vsyncpa [#allocation4], 0
    // Predicated region
    $region2: #{tpu_custom_call.1} parent=1 // pred_check
      _
    $region3: #{tpu_custom_call.1} parent=1 // pred_check_branch
      %9 = sbr.rel (0) target = $region5
    $region4: #{tpu_custom_call.1} parent=1 // pred_region
      %11 = vsyncadd [#allocation3], 0
      %s13 = sshll.u32 %s0, 4
      %s14 = int_to_ptr.hbm [resolvable:$true] %s13
      %s15 = sshll.u32 [#allocation2], 4
      %s16 = int_to_ptr.vmem [resolvable:$true] %s15
      %18 = dma.hbm_to_vmem [thread:$0]  %s14, 128, %s16, [#allocation3]
    $region5: #{tpu_custom_call.1} parent=1 // pred_fallthru
      _
    // Predicated region
    $region6: #{tpu_custom_call.1} parent=1 // pred_check
      _
    $region7: #{tpu_custom_call.1} parent=1 // pred_check_branch
      %20 = sbr.rel (0) target = $region9
    $region8: #{tpu_custom_call.1} parent=1 // pred_region
      %22 = dma.done [#allocation3], 128
    $region9: #{tpu_custom_call.1} parent=1 // pred_fallthru
      _
    %v23 = vld [vmem:[#allocation2] sm:$0xff]
    %24 = vmax.xlane.f32.xlu0 %v23
    %v25 = vpop.xlane.xlu0 %24
    %v26 = vsub.f32 %v23, %v25
    %v27 = vmul.f32 %v26, 1.442695
    %v28 = vpow.pop %v27
    %29 = vadd.xlane.f32.xlu0 %v28
    %v30 = vpop.xlane.xlu0 %29
    %v31 = vmul.f32 %v28, %v26
    %32 = vadd.xlane.f32.xlu0 %v31
    %v33 = vpop.xlane.xlu0 %32
    %v34 = vrcp.pop %v30
    %v35 = vmul.f32 %v30, %v34
    %v36 = vsub.f32 1.0, %v35
    %v37 = vmul.f32 %v34, %v36
    %v38 = vadd.f32 %v34, %v37
    %vm39 = vweird.f32 %v30
    %vm40 = vweird.f32 %v34
    %vm41 = vmor %vm39, %vm40
    %v42 = vsel %vm41, %v34, %v38
    %v43 = vand.u32 2147483647, %v30
    %vm44 = vcmp.eq.f32.partialorder %v43, 8.507059e+37
    %v45 = vand.u32 %v30, 2147483648
    %v46 = vor.u32 1.1754944e-38, %v45
    %v47 = vsel %vm44, %v46, %v42
    %v48 = vmul.f32 %v33, %v47
    %v49 = vlog2.pop %v30
    %v50 = vmul.f32 %v49, 0.6931472
    %v51 = vsub.f32 %v48, %v50
    %s52 = smul.u32 0, 8
    %v53 = vlaneseq
    %v54 = vshrl.u32 %v53, 7
    %v55 = vstv %s52
    %v56 = vadd.s32 %v55, %v54
    %vm57 = vcmp.lt.s32.totalorder %v56, 8
    %v58 = vsel %vm57, %v51, 0.0
    %vm59 = vcmask 7168
    %v60 = vsel %vm59, %v58, 0.0
    %61 = vadd.xlane.f32.xlu0 %v60
    %v62 = vpop.xlane.xlu0 %61
    %v63 = vrot.slane %v62, 4
    %v64 = vadd.f32 %v62, %v63
    %v65 = vrot.slane %v64, 2
    %v66 = vadd.f32 %v64, %v65
    %v67 = vrot.slane %v66, 1
    %v68 = vadd.f32 %v66, %v67
    %s69 = vtos %v68
    %v70 = vstv %s69
    %71 = vst [vmem:[#allocation5] sm:$0xff] %v70
    // Predicated region
    $region10: #{tpu_custom_call.1} parent=1 // pred_check
      _
    $region11: #{tpu_custom_call.1} parent=1 // pred_check_branch
      %73 = sbr.rel (0) target = $region13
    $region12: #{tpu_custom_call.1} parent=1 // pred_region
      %75 = vsyncadd [#allocation4], 0
      %s77 = sshll.u32 [#allocation5], 4
      %s78 = int_to_ptr.vmem [resolvable:$true] %s77
      %s79 = sshll.u32 %s1, 4
      %s80 = int_to_ptr.hbm [resolvable:$true] %s79
      %82 = dma.vmem_to_hbm [thread:$0]  %s78, 128, %s80, [#allocation4]
    $region13: #{tpu_custom_call.1} parent=1 // pred_fallthru
      _
    // Predicated region
    $region14: #{tpu_custom_call.1} parent=1 // pred_check
      _
    $region15: #{tpu_custom_call.1} parent=1 // pred_check_branch
      %84 = sbr.rel (0) target = $region17
    $region16: #{tpu_custom_call.1} parent=1 // pred_region
      %86 = dma.done [#allocation4], 128
    $region17: #{tpu_custom_call.1} parent=1 // pred_fallthru
      _
    %87 = vsyncpa [#allocation3], 1
    %88 = vsyncpa [#allocation4], 1

</llo_original>
